<compile_context>
chip_gen: v6e
topology: v6e:2x2x1
jax: 0.10.0
libtpu: 0.0.40
codegen_flags: <defaults>
</compile_context>

<pallas_src>
import functools

import jax
import jax.numpy as jnp
from jax.experimental import pallas as pl
from jax.experimental.pallas import tpu as pltpu


def _round_up(x, m):
    return (x + m - 1) // m * m


def _bottleneck_kernel(x_ref, w1_ref, b1_ref, w2_ref, b2_ref, mask_ref, o_ref,
                       *, add_shortcut, taps, lead, w_mid, w_out, use_im2col):
    """One grid step; all images of this batch group are folded onto the lane axis.

    x_ref:    (1, C1p, XW)   bf16 zero-extended folded input (lane-dense)
    w1_ref:   (C_p, 9*C1p)   bf16 im2col weights        [im2col path]
              (9, C_p, C1p)  bf16 per-tap weights        [tap-accumulation path]
    b1_ref:   (C_p, 1)       f32 folded-BN bias
    w2_ref:   like w1_ref for cv2
    b2_ref:   (C2p, 1)       f32
    mask_ref: (1, w_mid)     f32, 1.0 exactly on real pixels of cv1's domain
    o_ref:    (1, C2p, w_out) f32 lane-aligned output (wrapper crops to NCHW)
    """
    x = x_ref[0]                                           # (C1p, XW) bf16

    def conv3x3(w_ref, act, width, base):
        if use_im2col:
            # one K = 9*Cin matmul (only used while 9*Cin fits one MXU pass)
            patches = jnp.concatenate(
                [act[:, base + t: base + t + width] for t in taps], axis=0)
            return jnp.dot(w_ref[...], patches,
                           preferred_element_type=jnp.float32)
        # per-tap accumulation: no 9x im2col buffer, MXU-bound at large Cin
        acc = jnp.zeros((w_ref.shape[1], width), jnp.float32)
        for i, t in enumerate(taps):
            acc += jnp.dot(w_ref[i], act[:, base + t: base + t + width],
                           preferred_element_type=jnp.float32)
        return acc

    # ---- cv1: 3x3 conv + folded-BN bias + SiLU, re-zero padding ring / junk ----
    y1 = conv3x3(w1_ref, x, w_mid, base=lead - (taps[-1])) + b1_ref[...]
    y1 = (y1 * jax.nn.sigmoid(y1)) * mask_ref[...]
    y1 = y1.astype(x.dtype)                                # bf16 for the 2nd MXU pass

    # ---- cv2: consumes the masked cv1 output directly (already "padded") ----
    y2 = conv3x3(w2_ref, y1, w_out, base=0) + b2_ref[...]
    y2 = y2 * jax.nn.sigmoid(y2)

    if add_shortcut:
        # lead is a multiple of 128 -> lane-aligned slice (no cross-lane rotate)
        y2 = y2 + x[:, lead: lead + w_out].astype(jnp.float32)

    o_ref[0] = y2.astype(o_ref.dtype)


def bottleneck_pallas(x_nchw, w1, b1, w2, b2, *, add_shortcut,
                      grid_slices=1, use_im2col=None):
    """Bottleneck forward.

    x_nchw: (N, C1, H, W) float32 (PyTorch layout).
    w1, w2: HWIO 3x3 conv weights with BatchNorm folded in; b1, b2: folded biases.
    grid_slices: #grid steps the batch is split into (1 for single-TC v5e/v6e,
                 2 on dual-TC v7x so both cores get work).
    """
    N, C1, H, W = x_nchw.shape
    C_ = w1.shape[3]
    C2 = w2.shape[3]
    assert w1.shape[:3] == (3, 3, C1) and w2.shape[:3] == (3, 3, C_)
    assert N % grid_slices == 0
    G = grid_slices
    NB = N // G                            # images folded per grid step

    Hp, Wp = H + 2, W + 2
    S = Hp * Wp                            # per-image zero-padded flat spatial
    E = Wp + 1                             # max |flat tap offset| of a 3x3 window
    P = _round_up(S, 128)                  # lane-aligned per-image segment
    WL = NB * P                            # folded output lanes per grid step
    LEAD = _round_up(2 * E, 128)           # 128-aligned lead -> aligned shortcut
    TAIL = LEAD
    XW = LEAD + WL + TAIL                  # multiple of 128 -> no masked DMA tail
    WMID = WL + 2 * E                      # cv1 output width (feeds cv2's taps)

    # sublane-align channels to 16 (bf16 packing); extra rows/cols are zeros
    C1p = _round_up(C1, 16)
    C_p = _round_up(C_, 16)
    C2p = _round_up(C2, 16)
    if add_shortcut:
        assert C1 == C2 and C1p == C2p

    if use_im2col is None:
        # one big im2col matmul only while the contraction fits one MXU pass;
        # per-tap accumulation at production channel counts (no 9x buffer).
        use_im2col = 9 * max(C1p, C_p) <= 256

    # ---- weights / biases -> matmul form, cast to bf16 (pure parameter glue) ----
    w1p = jnp.pad(w1, ((0, 0), (0, 0), (0, C1p - C1), (0, C_p - C_)))
    w2p = jnp.pad(w2, ((0, 0), (0, 0), (0, C_p - C_), (0, C2p - C2)))
    if use_im2col:
        wm1 = jnp.transpose(w1p, (3, 0, 1, 2)).reshape(C_p, 9 * C1p)
        wm2 = jnp.transpose(w2p, (3, 0, 1, 2)).reshape(C2p, 9 * C_p)
        w1_spec = pl.BlockSpec((C_p, 9 * C1p), lambda g: (0, 0))
        w2_spec = pl.BlockSpec((C2p, 9 * C_p), lambda g: (0, 0))
    else:
        wm1 = jnp.transpose(w1p, (0, 1, 3, 2)).reshape(9, C_p, C1p)
        wm2 = jnp.transpose(w2p, (0, 1, 3, 2)).reshape(9, C2p, C_p)
        w1_spec = pl.BlockSpec((9, C_p, C1p), lambda g: (0, 0, 0))
        w2_spec = pl.BlockSpec((9, C2p, C_p), lambda g: (0, 0, 0))
    wm1 = wm1.astype(jnp.bfloat16)
    wm2 = wm2.astype(jnp.bfloat16)
    b1c = jnp.pad(b1.reshape(-1), (0, C_p - C_)).reshape(C_p, 1).astype(jnp.float32)
    b2c = jnp.pad(b2.reshape(-1), (0, C2p - C2)).reshape(C2p, 1).astype(jnp.float32)

    # ---- input layout plumbing: pad spatially, flatten spatial onto lanes,
    #      fold NB images into lane-aligned segments, zero-extend, cast bf16 ----
    xp = jnp.pad(x_nchw, ((0, 0), (0, C1p - C1), (1, 1), (1, 1)))       # (N,C1p,Hp,Wp)
    xf = jnp.pad(xp.reshape(N, C1p, S), ((0, 0), (0, 0), (0, P - S)))   # (N,C1p,P)
    xg = xf.reshape(G, NB, C1p, P).transpose(0, 2, 1, 3).reshape(G, C1p, WL)
    x_ext = jnp.pad(xg, ((0, 0), (0, 0), (LEAD, TAIL))).astype(jnp.bfloat16)

    # validity mask over cv1's working domain (1.0 on real pixels only)
    m = jnp.arange(WMID)
    g1 = m - E
    f = g1 % P
    row, col = f // Wp, f % Wp
    mask = ((g1 >= 0) & (g1 < WL) & (f < S)
            & (row >= 1) & (row <= H) & (col >= 1) & (col <= W))
    mask = mask.astype(jnp.float32).reshape(1, WMID)

    taps = tuple(kh * Wp + kw for kh in range(3) for kw in range(3))     # 0 .. 2E
    kernel = functools.partial(
        _bottleneck_kernel, add_shortcut=add_shortcut, taps=taps,
        lead=LEAD, w_mid=WMID, w_out=WL, use_im2col=use_im2col)

    flops = 2 * 9 * H * W * N * (C1 * C_ + C_ * C2)
    transcendentals = N * H * W * (C_ + C2)
    bytes_accessed = int(x_ext.size * 2 + wm1.size * 2 + wm2.size * 2
                         + (b1c.size + b2c.size + mask.size) * 4
                         + G * C2p * WL * 4)

    out_flat = pl.pallas_call(
        kernel,
        out_shape=jax.ShapeDtypeStruct((G, C2p, WL), jnp.float32),
        grid=(G,),
        in_specs=[
            pl.BlockSpec((1, C1p, XW), lambda g: (g, 0, 0)),
            w1_spec,
            pl.BlockSpec((C_p, 1), lambda g: (0, 0)),
            w2_spec,
            pl.BlockSpec((C2p, 1), lambda g: (0, 0)),
            pl.BlockSpec((1, WMID), lambda g: (0, 0)),
        ],
        out_specs=pl.BlockSpec((1, C2p, WL), lambda g: (g, 0, 0)),
        compiler_params=pltpu.CompilerParams(
            dimension_semantics=("parallel",),
            vmem_limit_bytes=32 * 1024 * 1024),
        cost_estimate=pl.CostEstimate(
            flops=flops, transcendentals=transcendentals,
            bytes_accessed=bytes_accessed),
    )(x_ext, wm1, b1c, wm2, b2c, mask)

    # undo the layout plumbing: (G, C2p, NB*P) -> (N, C2, H, W)
    out = (out_flat.reshape(G, C2p, NB, P).transpose(0, 2, 1, 3)
           .reshape(N, C2p, P)[:, :C2, :S]
           .reshape(N, C2, Hp, Wp)[:, :, 1:H + 1, 1:W + 1])
    return out.astype(x_nchw.dtype)


# --------------------------- parameter construction ---------------------------

def _make_conv_bn(key, cin, cout, ksize, eps=1e-5):
    """Deterministic Conv2d(bias=False)+BatchNorm2d params, folded for inference."""
    kw_, kg, kb, km, kv = jax.random.split(key, 5)
    w = 0.1 * jax.random.normal(kw_, (ksize, ksize, cin, cout), jnp.float32)  # HWIO
    gamma = 1.0 + 0.1 * jax.random.normal(kg, (cout,), jnp.float32)
    beta = 0.1 * jax.random.normal(kb, (cout,), jnp.float32)
    mean = 0.1 * jax.random.normal(km, (cout,), jnp.float32)
    var = 0.5 + jnp.abs(jax.random.normal(kv, (cout,), jnp.float32))
    scale = gamma / jnp.sqrt(var + eps)
    return w * scale[None, None, None, :], beta - mean * scale


# --------------------- pure-JAX reference (for checking) ----------------------

def _conv_bn_silu_ref(x, w, b):
    y = jax.lax.conv_general_dilated(
        x, w, window_strides=(1, 1), padding="SAME",
        dimension_numbers=("NCHW", "HWIO", "NCHW"))
    y = y + b.reshape(1, -1, 1, 1)
    return y * jax.nn.sigmoid(y)


def _bottleneck_ref(x, w1, b1, w2, b2, add_shortcut):
    y = _conv_bn_silu_ref(_conv_bn_silu_ref(x, w1, b1), w2, b2)
    return x + y if add_shortcut else y


if __name__ == "__main__":
    # Bottleneck(c1=8, c2=8, shortcut=True, g=1, k=(3,3), e=0.5) -> c_ = 4, add = True
    c1, c2, e = 8, 8, 0.5
    c_ = int(c2 * e)
    shortcut = True
    add_shortcut = shortcut and (c1 == c2)

    key = jax.random.PRNGKey(0)
    kx, k1, k2 = jax.random.split(key, 3)

    x_nchw = jax.random.normal(kx, (2, c1, 16, 16), jnp.float32)  # PyTorch NCHW input
    w1, b1 = _make_conv_bn(k1, c1, c_, 3)   # cv1 (BN folded)
    w2, b2 = _make_conv_bn(k2, c_, c2, 3)   # cv2 (BN folded)

    ref = _bottleneck_ref(x_nchw, w1, b1, w2, b2, add_shortcut)

    # Main path: whole batch folded onto the lane axis (one grid step, im2col dot).
    out = bottleneck_pallas(x_nchw, w1, b1, w2, b2, add_shortcut=add_shortcut)
    out = jax.block_until_ready(out)
    assert out.shape == x_nchw.shape
    err = float(jnp.max(jnp.abs(out - ref)))
    assert jnp.allclose(out, ref, atol=3e-2, rtol=3e-2), err   # bf16 MXU operands

    # Alternate path: per-tap accumulation (production-channel lowering) with a
    # 2-slice "parallel" grid (dual-TensorCore v7x configuration).
    out2 = bottleneck_pallas(x_nchw, w1, b1, w2, b2, add_shortcut=add_shortcut,
                             grid_slices=2, use_im2col=False)
    out2 = jax.block_until_ready(out2)
    err2 = float(jnp.max(jnp.abs(out2 - ref)))
    assert jnp.allclose(out2, ref, atol=3e-2, rtol=3e-2), err2

    print("KERNEL_OK")
</pallas_src>

<mosaic_0001>
module attributes {stable_mosaic.version = 11 : i64} {
  func.func @_bottleneck_kernel(%arg0: i32, %arg1: memref<1x16x1024xbf16, #tpu.memory_space<vmem>>, %arg2: memref<16x144xbf16, #tpu.memory_space<vmem>>, %arg3: memref<16x1xf32, #tpu.memory_space<vmem>>, %arg4: memref<16x144xbf16, #tpu.memory_space<vmem>>, %arg5: memref<16x1xf32, #tpu.memory_space<vmem>>, %arg6: memref<1x806xf32, #tpu.memory_space<vmem>>, %arg7: memref<1x16x768xf32, #tpu.memory_space<vmem>>) attributes {dimension_semantics = [#tpu.dimension_semantics<parallel>], iteration_bounds = array<i64: 1>, scalar_prefetch = 0 : i64, scratch_operands = 0 : i64, tpu.core_type = #tpu.core_type<tc>, window_params = [{transform_indices = @transform_0, window_bounds = array<i64: 1, 16, 1024>}, {pipeline_mode = #tpu.pipeline_mode<synchronous>, transform_indices = @transform_1, window_bounds = array<i64: 16, 144>}, {pipeline_mode = #tpu.pipeline_mode<synchronous>, transform_indices = @transform_2, window_bounds = array<i64: 16, 1>}, {pipeline_mode = #tpu.pipeline_mode<synchronous>, transform_indices = @transform_3, window_bounds = array<i64: 16, 144>}, {pipeline_mode = #tpu.pipeline_mode<synchronous>, transform_indices = @transform_4, window_bounds = array<i64: 16, 1>}, {pipeline_mode = #tpu.pipeline_mode<synchronous>, transform_indices = @transform_5, window_bounds = array<i64: 1, 806>}, {transform_indices = @transform_6, window_bounds = array<i64: 1, 16, 768>}]} {
    %c0 = arith.constant 0 : index
    %c0_0 = arith.constant 0 : index
    %c0_1 = arith.constant 0 : index
    %0 = vector.load %arg1[%c0, %c0_0, %c0_1] : memref<1x16x1024xbf16, #tpu.memory_space<vmem>>, vector<1x16x1024xbf16>
    %1 = vector.shape_cast %0 : vector<1x16x1024xbf16> to vector<16x1024xbf16>
    %2 = vector.extract_strided_slice %1 {offsets = [0, 90], sizes = [16, 806], strides = [1, 1]} : vector<16x1024xbf16> to vector<16x806xbf16>
    %3 = vector.extract_strided_slice %1 {offsets = [0, 91], sizes = [16, 806], strides = [1, 1]} : vector<16x1024xbf16> to vector<16x806xbf16>
    %4 = vector.extract_strided_slice %1 {offsets = [0, 92], sizes = [16, 806], strides = [1, 1]} : vector<16x1024xbf16> to vector<16x806xbf16>
    %5 = vector.extract_strided_slice %1 {offsets = [0, 108], sizes = [16, 806], strides = [1, 1]} : vector<16x1024xbf16> to vector<16x806xbf16>
    %6 = vector.extract_strided_slice %1 {offsets = [0, 109], sizes = [16, 806], strides = [1, 1]} : vector<16x1024xbf16> to vector<16x806xbf16>
    %7 = vector.extract_strided_slice %1 {offsets = [0, 110], sizes = [16, 806], strides = [1, 1]} : vector<16x1024xbf16> to vector<16x806xbf16>
    %8 = vector.extract_strided_slice %1 {offsets = [0, 126], sizes = [16, 806], strides = [1, 1]} : vector<16x1024xbf16> to vector<16x806xbf16>
    %9 = vector.extract_strided_slice %1 {offsets = [0, 127], sizes = [16, 806], strides = [1, 1]} : vector<16x1024xbf16> to vector<16x806xbf16>
    %10 = vector.extract_strided_slice %1 {offsets = [0, 128], sizes = [16, 806], strides = [1, 1]} : vector<16x1024xbf16> to vector<16x806xbf16>
    %11 = tpu.concatenate %2, %3, %4, %5, %6, %7, %8, %9, %10 in 0 : vector<16x806xbf16>, vector<16x806xbf16>, vector<16x806xbf16>, vector<16x806xbf16>, vector<16x806xbf16>, vector<16x806xbf16>, vector<16x806xbf16>, vector<16x806xbf16>, vector<16x806xbf16> -> vector<144x806xbf16>
    %c0_2 = arith.constant 0 : index
    %c0_3 = arith.constant 0 : index
    %12 = vector.load %arg2[%c0_2, %c0_3] : memref<16x144xbf16, #tpu.memory_space<vmem>>, vector<16x144xbf16>
    %cst = arith.constant dense<0.000000e+00> : vector<16x806xf32>
    %13 = tpu.matmul %12, %11, %cst {dimension_numbers = #tpu.dot_dimension_numbers<[1], [0], [0], [1], [0, 0, 1, 1], [], []>} : vector<16x144xbf16>, vector<144x806xbf16>, vector<16x806xf32> -> vector<16x806xf32>
    %c0_4 = arith.constant 0 : index
    %c0_5 = arith.constant 0 : index
    %14 = vector.load %arg3[%c0_4, %c0_5] : memref<16x1xf32, #tpu.memory_space<vmem>>, vector<16x1xf32>
    %15 = vector.broadcast %14 : vector<16x1xf32> to vector<16x806xf32>
    %16 = arith.addf %13, %15 : vector<16x806xf32>
    %17 = arith.negf %16 : vector<16x806xf32>
    %18 = math.exp %17 : vector<16x806xf32>
    %cst_6 = arith.constant 1.000000e+00 : f32
    %19 = vector.broadcast %cst_6 : f32 to vector<16x806xf32>
    %20 = arith.addf %19, %18 : vector<16x806xf32>
    %21 = arith.divf %19, %20 : vector<16x806xf32>
    %22 = arith.mulf %16, %21 : vector<16x806xf32>
    %c0_7 = arith.constant 0 : index
    %c0_8 = arith.constant 0 : index
    %23 = vector.load %arg6[%c0_7, %c0_8] : memref<1x806xf32, #tpu.memory_space<vmem>>, vector<1x806xf32>
    %24 = vector.broadcast %23 : vector<1x806xf32> to vector<16x806xf32>
    %25 = arith.mulf %22, %24 : vector<16x806xf32>
    %26 = arith.truncf %25 : vector<16x806xf32> to vector<16x806xbf16>
    %27 = vector.extract_strided_slice %26 {offsets = [0, 0], sizes = [16, 768], strides = [1, 1]} : vector<16x806xbf16> to vector<16x768xbf16>
    %28 = vector.extract_strided_slice %26 {offsets = [0, 1], sizes = [16, 768], strides = [1, 1]} : vector<16x806xbf16> to vector<16x768xbf16>
    %29 = vector.extract_strided_slice %26 {offsets = [0, 2], sizes = [16, 768], strides = [1, 1]} : vector<16x806xbf16> to vector<16x768xbf16>
    %30 = vector.extract_strided_slice %26 {offsets = [0, 18], sizes = [16, 768], strides = [1, 1]} : vector<16x806xbf16> to vector<16x768xbf16>
    %31 = vector.extract_strided_slice %26 {offsets = [0, 19], sizes = [16, 768], strides = [1, 1]} : vector<16x806xbf16> to vector<16x768xbf16>
    %32 = vector.extract_strided_slice %26 {offsets = [0, 20], sizes = [16, 768], strides = [1, 1]} : vector<16x806xbf16> to vector<16x768xbf16>
    %33 = vector.extract_strided_slice %26 {offsets = [0, 36], sizes = [16, 768], strides = [1, 1]} : vector<16x806xbf16> to vector<16x768xbf16>
    %34 = vector.extract_strided_slice %26 {offsets = [0, 37], sizes = [16, 768], strides = [1, 1]} : vector<16x806xbf16> to vector<16x768xbf16>
    %35 = vector.extract_strided_slice %26 {offsets = [0, 38], sizes = [16, 768], strides = [1, 1]} : vector<16x806xbf16> to vector<16x768xbf16>
    %36 = tpu.concatenate %27, %28, %29, %30, %31, %32, %33, %34, %35 in 0 : vector<16x768xbf16>, vector<16x768xbf16>, vector<16x768xbf16>, vector<16x768xbf16>, vector<16x768xbf16>, vector<16x768xbf16>, vector<16x768xbf16>, vector<16x768xbf16>, vector<16x768xbf16> -> vector<144x768xbf16>
    %c0_9 = arith.constant 0 : index
    %c0_10 = arith.constant 0 : index
    %37 = vector.load %arg4[%c0_9, %c0_10] : memref<16x144xbf16, #tpu.memory_space<vmem>>, vector<16x144xbf16>
    %cst_11 = arith.constant dense<0.000000e+00> : vector<16x768xf32>
    %38 = tpu.matmul %37, %36, %cst_11 {dimension_numbers = #tpu.dot_dimension_numbers<[1], [0], [0], [1], [0, 0, 1, 1], [], []>} : vector<16x144xbf16>, vector<144x768xbf16>, vector<16x768xf32> -> vector<16x768xf32>
    %c0_12 = arith.constant 0 : index
    %c0_13 = arith.constant 0 : index
    %39 = vector.load %arg5[%c0_12, %c0_13] : memref<16x1xf32, #tpu.memory_space<vmem>>, vector<16x1xf32>
    %40 = vector.broadcast %39 : vector<16x1xf32> to vector<16x768xf32>
    %41 = arith.addf %38, %40 : vector<16x768xf32>
    %42 = arith.negf %41 : vector<16x768xf32>
    %43 = math.exp %42 : vector<16x768xf32>
    %cst_14 = arith.constant 1.000000e+00 : f32
    %44 = vector.broadcast %cst_14 : f32 to vector<16x768xf32>
    %45 = arith.addf %44, %43 : vector<16x768xf32>
    %46 = arith.divf %44, %45 : vector<16x768xf32>
    %47 = arith.mulf %41, %46 : vector<16x768xf32>
    %48 = vector.extract_strided_slice %1 {offsets = [0, 128], sizes = [16, 768], strides = [1, 1]} : vector<16x1024xbf16> to vector<16x768xbf16>
    %49 = arith.extf %48 : vector<16x768xbf16> to vector<16x768xf32>
    %50 = arith.addf %47, %49 : vector<16x768xf32>
    %c0_15 = arith.constant 0 : index
    %c0_16 = arith.constant 0 : index
    %c0_17 = arith.constant 0 : index
    %51 = vector.load %arg7[%c0_15, %c0_16, %c0_17] : memref<1x16x768xf32, #tpu.memory_space<vmem>>, vector<1x16x768xf32>
    %52 = vector.shape_cast %51 : vector<1x16x768xf32> to vector<16x768xf32>
    %53 = vector.shape_cast %50 : vector<16x768xf32> to vector<1x16x768xf32>
    tpu.vector_store %arg7[%c0_15, %c0_16, %c0_17], %53 {strides = array<i32>} : memref<1x16x768xf32, #tpu.memory_space<vmem>>, vector<1x16x768xf32>,
    return
  }
  func.func @transform_0(%arg0: i32) -> (i32, i32, i32) {
    %c0_i32 = arith.constant 0 : i32
    %c0_i32_0 = arith.constant 0 : i32
    %c0_i32_1 = arith.constant 0 : i32
    return %arg0, %c0_i32, %c0_i32_0 : i32, i32, i32
  }
  func.func @transform_1(%arg0: i32) -> (i32, i32) {
    %c0_i32 = arith.constant 0 : i32
    %c0_i32_0 = arith.constant 0 : i32
    %c0_i32_1 = arith.constant 0 : i32
    return %c0_i32, %c0_i32_0 : i32, i32
  }
  func.func @transform_2(%arg0: i32) -> (i32, i32) {
    %c0_i32 = arith.constant 0 : i32
    %c0_i32_0 = arith.constant 0 : i32
    %c0_i32_1 = arith.constant 0 : i32
    return %c0_i32, %c0_i32_0 : i32, i32
  }
  func.func @transform_3(%arg0: i32) -> (i32, i32) {
    %c0_i32 = arith.constant 0 : i32
    %c0_i32_0 = arith.constant 0 : i32
    %c0_i32_1 = arith.constant 0 : i32
    return %c0_i32, %c0_i32_0 : i32, i32
  }
  func.func @transform_4(%arg0: i32) -> (i32, i32) {
    %c0_i32 = arith.constant 0 : i32
    %c0_i32_0 = arith.constant 0 : i32
    %c0_i32_1 = arith.constant 0 : i32
    return %c0_i32, %c0_i32_0 : i32, i32
  }
  func.func @transform_5(%arg0: i32) -> (i32, i32) {
    %c0_i32 = arith.constant 0 : i32
    %c0_i32_0 = arith.constant 0 : i32
    %c0_i32_1 = arith.constant 0 : i32
    return %c0_i32, %c0_i32_0 : i32, i32
  }
  func.func @transform_6(%arg0: i32) -> (i32, i32, i32) {
    %c0_i32 = arith.constant 0 : i32
    %c0_i32_0 = arith.constant 0 : i32
    %c0_i32_1 = arith.constant 0 : i32
    return %arg0, %c0_i32, %c0_i32_0 : i32, i32, i32
  }
}

</mosaic_0001>

<llo_original>
// kernel: tpu_custom_call.1
$region0: #{tpu_custom_call.1}
  #allocation0 [shape = 'u32[]', space=smem, size = 0x4, offset = 0x4, fixed_abs, tag = 'smem constant byte address 0x4 - core index']
  #allocation1 [shape = 'u32[144,128]{1,0:T(1,128)}', space=vmem, size = 0x12000, scoped, tag = 'internal scratch']
  %s0 = inlined_call_operand.hbm [shape: bf16[1,16,1024], index: 0, kind: input, shape index: {}]
  %s1 = inlined_call_operand.vmem [shape: bf16[16,144], index: 1, kind: input, shape index: {}]
  %s2 = inlined_call_operand.vmem [shape: f32[16,1], index: 2, kind: input, shape index: {}]
  %s3 = inlined_call_operand.vmem [shape: bf16[16,144], index: 3, kind: input, shape index: {}]
  %s4 = inlined_call_operand.vmem [shape: f32[16,1], index: 4, kind: input, shape index: {}]
  %s5 = inlined_call_operand.vmem [shape: f32[1,806], index: 5, kind: input, shape index: {}]
  %s6 = inlined_call_operand.hbm [shape: f32[1,16,768], index: 6, kind: output, shape index: {}]
  %s7 = sld [smem:[#allocation0]]
  $region38: #{tpu_custom_call.1} parent=0
    _
  %s9 = ssub.s32 1, %s7
  %s10 = scalar_select 0, %s9, %s7
  $region1: #{tpu_custom_call.1} parent=0
    #allocation2 [shape = 'u8[32768]{0}', space=vmem, size = 0x8000, scoped, tag = 'input window, operand 0, single buffered']
    #allocation3 [shape = 's32[1]{0}', space=sflag, size = 0x4, scoped, tag = 'scoped memory for tpu_custom_call.1']
    #allocation4 [shape = 's32[1]{0}', space=sflag, size = 0x4, scoped, tag = 'scoped memory for tpu_custom_call.1']
    #allocation5 [shape = 'u8[49152]{0}', space=vmem, size = 0xc000, scoped, tag = 'output window, operand 0, single buffered']
    %11 = vsyncpa [#allocation3], 0
    %12 = vsyncpa [#allocation4], 0
    // Predicated region
    $region2: #{tpu_custom_call.1} parent=1 // pred_check
      _
    $region3: #{tpu_custom_call.1} parent=1 // pred_check_branch
      %14 = sbr.rel (0) target = $region5
    $region4: #{tpu_custom_call.1} parent=1 // pred_region
      %s16 = ssub.s32 1024, 1024
      %17 = vsyncadd [#allocation3], %s16
      %s18 = sshll.u32 [#allocation2], 4
      %s19 = int_to_ptr.vmem [resolvable:$true] %s18
      %24 = dma.hbm_to_vmem [thread:$0]  %s0, 1024, %s19, [#allocation3], 512, 512, 32
    $region5: #{tpu_custom_call.1} parent=1 // pred_fallthru
      _
    // Predicated region
    $region6: #{tpu_custom_call.1} parent=1 // pred_check
      _
    $region7: #{tpu_custom_call.1} parent=1 // pred_check_branch
      %26 = sbr.rel (0) target = $region9
    $region8: #{tpu_custom_call.1} parent=1 // pred_region
      _
    $region9: #{tpu_custom_call.1} parent=1 // pred_fallthru
      _
    // Predicated region
    $region10: #{tpu_custom_call.1} parent=1 // pred_check
      _
    $region11: #{tpu_custom_call.1} parent=1 // pred_check_branch
      %28 = sbr.rel (0) target = $region13
    $region12: #{tpu_custom_call.1} parent=1 // pred_region
      _
    $region13: #{tpu_custom_call.1} parent=1 // pred_fallthru
      _
    // Predicated region
    $region14: #{tpu_custom_call.1} parent=1 // pred_check
      _
    $region15: #{tpu_custom_call.1} parent=1 // pred_check_branch
      %30 = sbr.rel (0) target = $region17
    $region16: #{tpu_custom_call.1} parent=1 // pred_region
      _
    $region17: #{tpu_custom_call.1} parent=1 // pred_fallthru
      _
    // Predicated region
    $region18: #{tpu_custom_call.1} parent=1 // pred_check
      _
    $region19: #{tpu_custom_call.1} parent=1 // pred_check_branch
      %32 = sbr.rel (0) target = $region21
    $region20: #{tpu_custom_call.1} parent=1 // pred_region
      _
    $region21: #{tpu_custom_call.1} parent=1 // pred_fallthru
      _
    // Predicated region
    $region22: #{tpu_custom_call.1} parent=1 // pred_check
      _
    $region23: #{tpu_custom_call.1} parent=1 // pred_check_branch
      %34 = sbr.rel (0) target = $region25
    $region24: #{tpu_custom_call.1} parent=1 // pred_region
      _
    $region25: #{tpu_custom_call.1} parent=1 // pred_fallthru
      _
    // Predicated region
    $region26: #{tpu_custom_call.1} parent=1 // pred_check
      _
    $region27: #{tpu_custom_call.1} parent=1 // pred_check_branch
      %36 = sbr.rel (0) target = $region29
    $region28: #{tpu_custom_call.1} parent=1 // pred_region
      %37 = dma.done [#allocation3], 1024
    $region29: #{tpu_custom_call.1} parent=1 // pred_fallthru
      _
    %v39 = vld [vmem:[#allocation2] sm:$0xff]
    %v40 = vld [vmem:[#allocation2 + $0x8] sm:$0xff]
    %v41 = vld [vmem:[#allocation2 + $0x10] sm:$0xff]
    %v42 = vld [vmem:[#allocation2 + $0x18] sm:$0xff]
    %v43 = vld [vmem:[#allocation2 + $0x20] sm:$0xff]
    %v44 = vld [vmem:[#allocation2 + $0x28] sm:$0xff]
    %v45 = vld [vmem:[#allocation2 + $0x30] sm:$0xff]
    %v46 = vld [vmem:[#allocation2 + $0x38] sm:$0xff]
    %v55 = vunpack.c.l.b16 %v39
    %v56 = vunpack.c.h.b16 %v39
    %v57 = vunpack.c.l.b16 %v40
    %v58 = vunpack.c.h.b16 %v40
    %v59 = vunpack.c.l.b16 %v41
    %v60 = vunpack.c.h.b16 %v41
    %v61 = vunpack.c.l.b16 %v42
    %v62 = vunpack.c.l.b16 %v43
    %v63 = vunpack.c.h.b16 %v43
    %v64 = vunpack.c.l.b16 %v44
    %v65 = vunpack.c.h.b16 %v44
    %v66 = vunpack.c.l.b16 %v45
    %v67 = vunpack.c.h.b16 %v45
    %v68 = vunpack.c.l.b16 %v46
    %v69 = vpack.c.b16 %v62, %v55
    %v70 = vpack.c.b16 %v63, %v56
    %v71 = vpack.c.b16 %v64, %v57
    %v72 = vpack.c.b16 %v65, %v58
    %v73 = vpack.c.b16 %v66, %v59
    %v74 = vpack.c.b16 %v67, %v60
    %v75 = vpack.c.b16 %v68, %v61
    %v76 = vunpack.c.h.b16 %v42
    %v77 = vunpack.c.h.b16 %v46
    %v78 = vpack.c.b16 %v77, %v76
    %79 = vrot.lane.b32.xlu0 %v69, 127
    %v80 = vpop.permute.xlu0 %79
    %81 = vrot.lane.b32.xlu0 %v70, 127
    %v82 = vpop.permute.xlu0 %81
    %83 = vrot.lane.b32.xlu0 %v71, 127
    %v84 = vpop.permute.xlu0 %83
    %85 = vrot.lane.b32.xlu0 %v72, 127
    %v86 = vpop.permute.xlu0 %85
    %87 = vrot.lane.b32.xlu0 %v73, 127
    %v88 = vpop.permute.xlu0 %87
    %89 = vrot.lane.b32.xlu0 %v74, 127
    %v90 = vpop.permute.xlu0 %89
    %91 = vrot.lane.b32.xlu0 %v75, 127
    %v92 = vpop.permute.xlu0 %91
    %93 = vrot.lane.b32.xlu0 %v78, 127
    %v94 = vpop.permute.xlu0 %93
    %vm95 = vcmask 1039360
    %v96 = vsel %vm95, %v80, %v82
    %v97 = vsel %vm95, %v82, %v84
    %v98 = vsel %vm95, %v84, %v86
    %v99 = vsel %vm95, %v86, %v88
    %v100 = vsel %vm95, %v88, %v90
    %v101 = vsel %vm95, %v90, %v92
    %v102 = vsel %vm95, %v92, %v94
    %103 = vrot.lane.b32.xlu0 %v69, 126
    %v104 = vpop.permute.xlu0 %103
    %105 = vrot.lane.b32.xlu0 %v70, 126
    %v106 = vpop.permute.xlu0 %105
    %107 = vrot.lane.b32.xlu0 %v71, 126
    %v108 = vpop.permute.xlu0 %107
    %109 = vrot.lane.b32.xlu0 %v72, 126
    %v110 = vpop.permute.xlu0 %109
    %111 = vrot.lane.b32.xlu0 %v73, 126
    %v112 = vpop.permute.xlu0 %111
    %113 = vrot.lane.b32.xlu0 %v74, 126
    %v114 = vpop.permute.xlu0 %113
    %115 = vrot.lane.b32.xlu0 %v75, 126
    %v116 = vpop.permute.xlu0 %115
    %117 = vrot.lane.b32.xlu0 %v78, 126
    %v118 = vpop.permute.xlu0 %117
    %vm119 = vcmask 1031168
    %v120 = vsel %vm119, %v104, %v106
    %v121 = vsel %vm119, %v106, %v108
    %v122 = vsel %vm119, %v108, %v110
    %v123 = vsel %vm119, %v110, %v112
    %v124 = vsel %vm119, %v112, %v114
    %v125 = vsel %vm119, %v114, %v116
    %v126 = vsel %vm119, %v116, %v118
    %127 = vrot.lane.b32.xlu0 %v69, 110
    %v128 = vpop.permute.xlu0 %127
    %129 = vrot.lane.b32.xlu0 %v70, 110
    %v130 = vpop.permute.xlu0 %129
    %131 = vrot.lane.b32.xlu0 %v71, 110
    %v132 = vpop.permute.xlu0 %131
    %133 = vrot.lane.b32.xlu0 %v72, 110
    %v134 = vpop.permute.xlu0 %133
    %135 = vrot.lane.b32.xlu0 %v73, 110
    %v136 = vpop.permute.xlu0 %135
    %137 = vrot.lane.b32.xlu0 %v74, 110
    %v138 = vpop.permute.xlu0 %137
    %139 = vrot.lane.b32.xlu0 %v75, 110
    %v140 = vpop.permute.xlu0 %139
    %141 = vrot.lane.b32.xlu0 %v78, 110
    %v142 = vpop.permute.xlu0 %141
    %vm143 = vcmask 900096
    %v144 = vsel %vm143, %v128, %v130
    %v145 = vsel %vm143, %v130, %v132
    %v146 = vsel %vm143, %v132, %v134
    %v147 = vsel %vm143, %v134, %v136
    %v148 = vsel %vm143, %v136, %v138
    %v149 = vsel %vm143, %v138, %v140
    %v150 = vsel %vm143, %v140, %v142
    %151 = vrot.lane.b32.xlu0 %v69, 109
    %v152 = vpop.permute.xlu0 %151
    %153 = vrot.lane.b32.xlu0 %v70, 109
    %v154 = vpop.permute.xlu0 %153
    %155 = vrot.lane.b32.xlu0 %v71, 109
    %v156 = vpop.permute.xlu0 %155
    %157 = vrot.lane.b32.xlu0 %v72, 109
    %v158 = vpop.permute.xlu0 %157
    %159 = vrot.lane.b32.xlu0 %v73, 109
    %v160 = vpop.permute.xlu0 %159
    %161 = vrot.lane.b32.xlu0 %v74, 109
    %v162 = vpop.permute.xlu0 %161
    %163 = vrot.lane.b32.xlu0 %v75, 109
    %v164 = vpop.permute.xlu0 %163
    %165 = vrot.lane.b32.xlu0 %v78, 109
    %v166 = vpop.permute.xlu0 %165
    %vm167 = vcmask 891904
    %v168 = vsel %vm167, %v152, %v154
    %v169 = vsel %vm167, %v154, %v156
    %v170 = vsel %vm167, %v156, %v158
    %v171 = vsel %vm167, %v158, %v160
    %v172 = vsel %vm167, %v160, %v162
    %v173 = vsel %vm167, %v162, %v164
    %v174 = vsel %vm167, %v164, %v166
    %175 = vrot.lane.b32.xlu0 %v69, 108
    %v176 = vpop.permute.xlu0 %175
    %177 = vrot.lane.b32.xlu0 %v70, 108
    %v178 = vpop.permute.xlu0 %177
    %179 = vrot.lane.b32.xlu0 %v71, 108
    %v180 = vpop.permute.xlu0 %179
    %181 = vrot.lane.b32.xlu0 %v72, 108
    %v182 = vpop.permute.xlu0 %181
    %183 = vrot.lane.b32.xlu0 %v73, 108
    %v184 = vpop.permute.xlu0 %183
    %185 = vrot.lane.b32.xlu0 %v74, 108
    %v186 = vpop.permute.xlu0 %185
    %187 = vrot.lane.b32.xlu0 %v75, 108
    %v188 = vpop.permute.xlu0 %187
    %189 = vrot.lane.b32.xlu0 %v78, 108
    %v190 = vpop.permute.xlu0 %189
    %vm191 = vcmask 883712
    %v192 = vsel %vm191, %v176, %v178
    %v193 = vsel %vm191, %v178, %v180
    %v194 = vsel %vm191, %v180, %v182
    %v195 = vsel %vm191, %v182, %v184
    %v196 = vsel %vm191, %v184, %v186
    %v197 = vsel %vm191, %v186, %v188
    %v198 = vsel %vm191, %v188, %v190
    %199 = vrot.lane.b32.xlu0 %v69, 92
    %v200 = vpop.permute.xlu0 %199
    %201 = vrot.lane.b32.xlu0 %v70, 92
    %v202 = vpop.permute.xlu0 %201
    %203 = vrot.lane.b32.xlu0 %v71, 92
    %v204 = vpop.permute.xlu0 %203
    %205 = vrot.lane.b32.xlu0 %v72, 92
    %v206 = vpop.permute.xlu0 %205
    %207 = vrot.lane.b32.xlu0 %v73, 92
    %v208 = vpop.permute.xlu0 %207
    %209 = vrot.lane.b32.xlu0 %v74, 92
    %v210 = vpop.permute.xlu0 %209
    %211 = vrot.lane.b32.xlu0 %v75, 92
    %v212 = vpop.permute.xlu0 %211
    %213 = vrot.lane.b32.xlu0 %v78, 92
    %v214 = vpop.permute.xlu0 %213
    %vm215 = vcmask 752640
    %v216 = vsel %vm215, %v200, %v202
    %v217 = vsel %vm215, %v202, %v204
    %v218 = vsel %vm215, %v204, %v206
    %v219 = vsel %vm215, %v206, %v208
    %v220 = vsel %vm215, %v208, %v210
    %v221 = vsel %vm215, %v210, %v212
    %v222 = vsel %vm215, %v212, %v214
    %223 = vrot.lane.b32.xlu0 %v69, 91
    %v224 = vpop.permute.xlu0 %223
    %225 = vrot.lane.b32.xlu0 %v70, 91
    %v226 = vpop.permute.xlu0 %225
    %227 = vrot.lane.b32.xlu0 %v71, 91
    %v228 = vpop.permute.xlu0 %227
    %229 = vrot.lane.b32.xlu0 %v72, 91
    %v230 = vpop.permute.xlu0 %229
    %231 = vrot.lane.b32.xlu0 %v73, 91
    %v232 = vpop.permute.xlu0 %231
    %233 = vrot.lane.b32.xlu0 %v74, 91
    %v234 = vpop.permute.xlu0 %233
    %235 = vrot.lane.b32.xlu0 %v75, 91
    %v236 = vpop.permute.xlu0 %235
    %237 = vrot.lane.b32.xlu0 %v78, 91
    %v238 = vpop.permute.xlu0 %237
    %vm239 = vcmask 744448
    %v240 = vsel %vm239, %v224, %v226
    %v241 = vsel %vm239, %v226, %v228
    %v242 = vsel %vm239, %v228, %v230
    %v243 = vsel %vm239, %v230, %v232
    %v244 = vsel %vm239, %v232, %v234
    %v245 = vsel %vm239, %v234, %v236
    %v246 = vsel %vm239, %v236, %v238
    %247 = vrot.lane.b32.xlu0 %v70, 90
    %v248 = vpop.permute.xlu0 %247
    %249 = vrot.lane.b32.xlu0 %v71, 90
    %v250 = vpop.permute.xlu0 %249
    %251 = vrot.lane.b32.xlu0 %v72, 90
    %v252 = vpop.permute.xlu0 %251
    %253 = vrot.lane.b32.xlu0 %v73, 90
    %v254 = vpop.permute.xlu0 %253
    %255 = vrot.lane.b32.xlu0 %v74, 90
    %v256 = vpop.permute.xlu0 %255
    %257 = vrot.lane.b32.xlu0 %v75, 90
    %v258 = vpop.permute.xlu0 %257
    %259 = vrot.lane.b32.xlu0 %v78, 90
    %v260 = vpop.permute.xlu0 %259
    %vm261 = vcmask 736256
    %v262 = vsel %vm261, %v248, %v250
    %v263 = vsel %vm261, %v250, %v252
    %v264 = vsel %vm261, %v252, %v254
    %v265 = vsel %vm261, %v254, %v256
    %v266 = vsel %vm261, %v256, %v258
    %v267 = vsel %vm261, %v258, %v260
    %v268 = vld [vmem:[%s1] sm:$0xff]
    %v269 = vld [vmem:[%s1 + $0x8] sm:$0xff]
    %v270 = vld [vmem:[%s2] sm:$0xff]
    %v271 = vld [vmem:[%s2 + $0x8] sm:$0xff]
    %273 = vset.pattern.permute.xlu0 0
    %274 = vperm.xlu0 %273, %v270
    %v275 = vpop.permute.xlu0 %274
    %278 = vset.pattern.permute.xlu0 0
    %279 = vperm.xlu0 %278, %v271
    %v280 = vpop.permute.xlu0 %279
    %v284 = vunpack.c.l.b16 %v268
    %v285 = vunpack.c.h.b16 %v268
    %v286 = vunpack.c.l.b16 %v269
    %v287 = vunpack.c.h.b16 %v269
    %v288 = vpack.c.b16 %v286, %v284
    %v289 = vpack.c.b16 %v287, %v285
    %291 = vrot.lane.b32.xlu0 %v69, 38
    %v292 = vpop.permute.xlu0 %291
    %293 = vrot.lane.b32.xlu0 %v70, 38
    %v294 = vpop.permute.xlu0 %293
    %295 = vrot.lane.b32.xlu0 %v71, 38
    %v296 = vpop.permute.xlu0 %295
    %297 = vrot.lane.b32.xlu0 %v72, 38
    %v298 = vpop.permute.xlu0 %297
    %299 = vrot.lane.b32.xlu0 %v73, 38
    %v300 = vpop.permute.xlu0 %299
    %301 = vrot.lane.b32.xlu0 %v74, 38
    %v302 = vpop.permute.xlu0 %301
    %303 = vrot.lane.b32.xlu0 %v75, 38
    %v304 = vpop.permute.xlu0 %303
    %305 = vrot.lane.b32.xlu0 %v96, 38
    %v306 = vpop.permute.xlu0 %305
    %307 = vrot.lane.b32.xlu0 %v97, 38
    %v308 = vpop.permute.xlu0 %307
    %309 = vrot.lane.b32.xlu0 %v98, 38
    %v310 = vpop.permute.xlu0 %309
    %311 = vrot.lane.b32.xlu0 %v99, 38
    %v312 = vpop.permute.xlu0 %311
    %313 = vrot.lane.b32.xlu0 %v100, 38
    %v314 = vpop.permute.xlu0 %313
    %315 = vrot.lane.b32.xlu0 %v101, 38
    %v316 = vpop.permute.xlu0 %315
    %317 = vrot.lane.b32.xlu0 %v102, 38
    %v318 = vpop.permute.xlu0 %317
    %319 = vrot.lane.b32.xlu0 %v120, 38
    %v320 = vpop.permute.xlu0 %319
    %321 = vrot.lane.b32.xlu0 %v121, 38
    %v322 = vpop.permute.xlu0 %321
    %323 = vrot.lane.b32.xlu0 %v122, 38
    %v324 = vpop.permute.xlu0 %323
    %325 = vrot.lane.b32.xlu0 %v123, 38
    %v326 = vpop.permute.xlu0 %325
    %327 = vrot.lane.b32.xlu0 %v124, 38
    %v328 = vpop.permute.xlu0 %327
    %329 = vrot.lane.b32.xlu0 %v125, 38
    %v330 = vpop.permute.xlu0 %329
    %331 = vrot.lane.b32.xlu0 %v126, 38
    %v332 = vpop.permute.xlu0 %331
    %333 = vrot.lane.b32.xlu0 %v144, 38
    %v334 = vpop.permute.xlu0 %333
    %335 = vrot.lane.b32.xlu0 %v145, 38
    %v336 = vpop.permute.xlu0 %335
    %337 = vrot.lane.b32.xlu0 %v146, 38
    %v338 = vpop.permute.xlu0 %337
    %339 = vrot.lane.b32.xlu0 %v147, 38
    %v340 = vpop.permute.xlu0 %339
    %341 = vrot.lane.b32.xlu0 %v148, 38
    %v342 = vpop.permute.xlu0 %341
    %343 = vrot.lane.b32.xlu0 %v149, 38
    %v344 = vpop.permute.xlu0 %343
    %345 = vrot.lane.b32.xlu0 %v150, 38
    %v346 = vpop.permute.xlu0 %345
    %347 = vrot.lane.b32.xlu0 %v168, 38
    %v348 = vpop.permute.xlu0 %347
    %349 = vrot.lane.b32.xlu0 %v169, 38
    %v350 = vpop.permute.xlu0 %349
    %351 = vrot.lane.b32.xlu0 %v170, 38
    %v352 = vpop.permute.xlu0 %351
    %353 = vrot.lane.b32.xlu0 %v171, 38
    %v354 = vpop.permute.xlu0 %353
    %355 = vrot.lane.b32.xlu0 %v172, 38
    %v356 = vpop.permute.xlu0 %355
    %357 = vrot.lane.b32.xlu0 %v173, 38
    %v358 = vpop.permute.xlu0 %357
    %359 = vrot.lane.b32.xlu0 %v174, 38
    %v360 = vpop.permute.xlu0 %359
    %361 = vrot.lane.b32.xlu0 %v192, 38
    %v362 = vpop.permute.xlu0 %361
    %363 = vrot.lane.b32.xlu0 %v193, 38
    %v364 = vpop.permute.xlu0 %363
    %365 = vrot.lane.b32.xlu0 %v194, 38
    %v366 = vpop.permute.xlu0 %365
    %367 = vrot.lane.b32.xlu0 %v195, 38
    %v368 = vpop.permute.xlu0 %367
    %369 = vrot.lane.b32.xlu0 %v196, 38
    %v370 = vpop.permute.xlu0 %369
    %371 = vrot.lane.b32.xlu0 %v197, 38
    %v372 = vpop.permute.xlu0 %371
    %373 = vrot.lane.b32.xlu0 %v198, 38
    %v374 = vpop.permute.xlu0 %373
    %375 = vrot.lane.b32.xlu0 %v216, 38
    %v376 = vpop.permute.xlu0 %375
    %377 = vrot.lane.b32.xlu0 %v217, 38
    %v378 = vpop.permute.xlu0 %377
    %379 = vrot.lane.b32.xlu0 %v218, 38
    %v380 = vpop.permute.xlu0 %379
    %381 = vrot.lane.b32.xlu0 %v219, 38
    %v382 = vpop.permute.xlu0 %381
    %383 = vrot.lane.b32.xlu0 %v220, 38
    %v384 = vpop.permute.xlu0 %383
    %385 = vrot.lane.b32.xlu0 %v221, 38
    %v386 = vpop.permute.xlu0 %385
    %387 = vrot.lane.b32.xlu0 %v222, 38
    %v388 = vpop.permute.xlu0 %387
    %389 = vrot.lane.b32.xlu0 %v240, 38
    %v390 = vpop.permute.xlu0 %389
    %391 = vrot.lane.b32.xlu0 %v241, 38
    %v392 = vpop.permute.xlu0 %391
    %393 = vrot.lane.b32.xlu0 %v242, 38
    %v394 = vpop.permute.xlu0 %393
    %395 = vrot.lane.b32.xlu0 %v243, 38
    %v396 = vpop.permute.xlu0 %395
    %397 = vrot.lane.b32.xlu0 %v244, 38
    %v398 = vpop.permute.xlu0 %397
    %399 = vrot.lane.b32.xlu0 %v245, 38
    %v400 = vpop.permute.xlu0 %399
    %401 = vrot.lane.b32.xlu0 %v246, 38
    %v402 = vpop.permute.xlu0 %401
    %403 = vrot.lane.b32.xlu0 %v248, 38
    %v404 = vpop.permute.xlu0 %403
    %405 = vrot.lane.b32.xlu0 %v262, 38
    %v406 = vpop.permute.xlu0 %405
    %407 = vrot.lane.b32.xlu0 %v263, 38
    %v408 = vpop.permute.xlu0 %407
    %409 = vrot.lane.b32.xlu0 %v264, 38
    %v410 = vpop.permute.xlu0 %409
    %411 = vrot.lane.b32.xlu0 %v265, 38
    %v412 = vpop.permute.xlu0 %411
    %413 = vrot.lane.b32.xlu0 %v266, 38
    %v414 = vpop.permute.xlu0 %413
    %415 = vrot.lane.b32.xlu0 %v267, 38
    %v416 = vpop.permute.xlu0 %415
    %vm417 = vcmask 310272
    %v418 = vsel %vm417, %v292, %v294
    %v419 = vsel %vm417, %v294, %v296
    %v420 = vsel %vm417, %v296, %v298
    %v421 = vsel %vm417, %v298, %v300
    %v422 = vsel %vm417, %v300, %v302
    %v423 = vsel %vm417, %v302, %v304
    %v424 = vsel %vm417, %v306, %v308
    %v425 = vsel %vm417, %v308, %v310
    %v426 = vsel %vm417, %v310, %v312
    %v427 = vsel %vm417, %v312, %v314
    %v428 = vsel %vm417, %v314, %v316
    %v429 = vsel %vm417, %v316, %v318
    %v430 = vsel %vm417, %v320, %v322
    %v431 = vsel %vm417, %v322, %v324
    %v432 = vsel %vm417, %v324, %v326
    %v433 = vsel %vm417, %v326, %v328
    %v434 = vsel %vm417, %v328, %v330
    %v435 = vsel %vm417, %v330, %v332
    %v436 = vsel %vm417, %v334, %v336
    %v437 = vsel %vm417, %v336, %v338
    %v438 = vsel %vm417, %v338, %v340
    %v439 = vsel %vm417, %v340, %v342
    %v440 = vsel %vm417, %v342, %v344
    %v441 = vsel %vm417, %v344, %v346
    %v442 = vsel %vm417, %v348, %v350
    %v443 = vsel %vm417, %v350, %v352
    %v444 = vsel %vm417, %v352, %v354
    %v445 = vsel %vm417, %v354, %v356
    %v446 = vsel %vm417, %v356, %v358
    %v447 = vsel %vm417, %v358, %v360
    %v448 = vsel %vm417, %v362, %v364
    %v449 = vsel %vm417, %v364, %v366
    %v450 = vsel %vm417, %v366, %v368
    %v451 = vsel %vm417, %v368, %v370
    %v452 = vsel %vm417, %v370, %v372
    %v453 = vsel %vm417, %v372, %v374
    %v454 = vsel %vm417, %v376, %v378
    %v455 = vsel %vm417, %v378, %v380
    %v456 = vsel %vm417, %v380, %v382
    %v457 = vsel %vm417, %v382, %v384
    %v458 = vsel %vm417, %v384, %v386
    %v459 = vsel %vm417, %v386, %v388
    %v460 = vsel %vm417, %v390, %v392
    %v461 = vsel %vm417, %v392, %v394
    %v462 = vsel %vm417, %v394, %v396
    %v463 = vsel %vm417, %v396, %v398
    %v464 = vsel %vm417, %v398, %v400
    %v465 = vsel %vm417, %v400, %v402
    %v466 = vsel %vm417, %v404, %v406
    %v467 = vsel %vm417, %v406, %v408
    %v468 = vsel %vm417, %v408, %v410
    %v469 = vsel %vm417, %v410, %v412
    %v470 = vsel %vm417, %v412, %v414
    %v471 = vsel %vm417, %v414, %v416
    %vm535 = vcmask 130048
    %v537 = vsel %vm535, %v289, 0
    %539 = vmatprep.subr.bf16.mxu0 %v461
    %540 = vmatpush1.bf16.msra.mxu0 %v460
    %541 = vmatprep.subr.bf16.mxu0 %v455
    %542 = vmatpush1.bf16.msra.mxu0 %v454
    %543 = vmatprep.subr.bf16.mxu0 %v449
    %544 = vmatpush1.bf16.msra.mxu0 %v448
    %545 = vmatprep.subr.bf16.mxu0 %v443
    %546 = vmatpush1.bf16.msra.mxu0 %v442
    %547 = vmatprep.subr.bf16.mxu0 %v437
    %548 = vmatpush1.bf16.msra.mxu0 %v436
    %549 = vmatprep.subr.bf16.mxu0 %v431
    %550 = vmatpush1.bf16.msra.mxu0 %v430
    %551 = vmatprep.subr.bf16.mxu0 %v425
    %552 = vmatpush1.bf16.msra.mxu0 %v424
    %553 = vmatprep.subr.bf16.mxu0 %v419
    %554 = vmatpush1.bf16.msra.mxu0 %v418
    %555 = vmatprep.subr.bf16.mxu0 0
    %556 = vmatpush2.bf16.msra.mxu0 0
    %557 = vmatprep.subr.bf16.mxu0 0
    %558 = vmatpush2.bf16.msra.mxu0 0
    %559 = vmatprep.subr.bf16.mxu0 0
    %560 = vmatpush2.bf16.msra.mxu0 0
    %561 = vmatprep.subr.bf16.mxu0 0
    %562 = vmatpush2.bf16.msra.mxu0 0
    %563 = vmatprep.subr.bf16.mxu0 0
    %564 = vmatpush2.bf16.msra.mxu0 0
    %565 = vmatprep.subr.bf16.mxu0 0
    %566 = vmatpush2.bf16.msra.mxu0 0
    %567 = vmatprep.subr.bf16.mxu0 0
    %568 = vmatpush2.bf16.msra.mxu0 0
    %569 = vmatprep.subr.bf16.mxu0 %v467
    %570 = vmatpush2.bf16.msra.mxu0 %v466
    %571 = vmatprep.mubr.bf16.mxu0 %v537
    %572 = vmatmul.mubr.bf16.gmra.mxu0 %v288
    %v573 = vpop.f32.mrf.mxu0
    %v574 = vadd.f32 %v275, %v573
    %v575 = vpop.f32.mrf.mxu0
    %v576 = vadd.f32 %v275, %v575
    %v577 = vpop.f32.mrf.mxu0
    %v578 = vadd.f32 %v280, %v577
    %v579 = vpop.f32.mrf.mxu0
    %v580 = vadd.f32 %v280, %v579
    %581 = vdwg.mxu0
    %582 = vmatprep.subr.bf16.mxu0 %v463
    %583 = vmatpush1.bf16.msra.mxu0 %v462
    %584 = vmatprep.subr.bf16.mxu0 %v457
    %585 = vmatpush1.bf16.msra.mxu0 %v456
    %586 = vmatprep.subr.bf16.mxu0 %v451
    %587 = vmatpush1.bf16.msra.mxu0 %v450
    %588 = vmatprep.subr.bf16.mxu0 %v445
    %589 = vmatpush1.bf16.msra.mxu0 %v444
    %590 = vmatprep.subr.bf16.mxu0 %v439
    %591 = vmatpush1.bf16.msra.mxu0 %v438
    %592 = vmatprep.subr.bf16.mxu0 %v433
    %593 = vmatpush1.bf16.msra.mxu0 %v432
    %594 = vmatprep.subr.bf16.mxu0 %v427
    %595 = vmatpush1.bf16.msra.mxu0 %v426
    %596 = vmatprep.subr.bf16.mxu0 %v421
    %597 = vmatpush1.bf16.msra.mxu0 %v420
    %598 = vmatprep.subr.bf16.mxu0 0
    %599 = vmatpush2.bf16.msra.mxu0 0
    %600 = vmatprep.subr.bf16.mxu0 0
    %601 = vmatpush2.bf16.msra.mxu0 0
    %602 = vmatprep.subr.bf16.mxu0 0
    %603 = vmatpush2.bf16.msra.mxu0 0
    %604 = vmatprep.subr.bf16.mxu0 0
    %605 = vmatpush2.bf16.msra.mxu0 0
    %606 = vmatprep.subr.bf16.mxu0 0
    %607 = vmatpush2.bf16.msra.mxu0 0
    %608 = vmatprep.subr.bf16.mxu0 0
    %609 = vmatpush2.bf16.msra.mxu0 0
    %610 = vmatprep.subr.bf16.mxu0 0
    %611 = vmatpush2.bf16.msra.mxu0 0
    %612 = vmatprep.subr.bf16.mxu0 %v469
    %613 = vmatpush2.bf16.msra.mxu0 %v468
    %614 = vmatprep.mubr.bf16.mxu0 %v537
    %615 = vmatmul.mubr.bf16.gmra.mxu0 %v288
    %v616 = vpop.f32.mrf.mxu0
    %v617 = vadd.f32 %v275, %v616
    %v618 = vpop.f32.mrf.mxu0
    %v619 = vadd.f32 %v275, %v618
    %v620 = vpop.f32.mrf.mxu0
    %v621 = vadd.f32 %v280, %v620
    %v622 = vpop.f32.mrf.mxu0
    %v623 = vadd.f32 %v280, %v622
    %624 = vdwg.mxu0
    %625 = vmatprep.subr.bf16.mxu0 %v465
    %626 = vmatpush1.bf16.msra.mxu0 %v464
    %627 = vmatprep.subr.bf16.mxu0 %v459
    %628 = vmatpush1.bf16.msra.mxu0 %v458
    %629 = vmatprep.subr.bf16.mxu0 %v453
    %630 = vmatpush1.bf16.msra.mxu0 %v452
    %631 = vmatprep.subr.bf16.mxu0 %v447
    %632 = vmatpush1.bf16.msra.mxu0 %v446
    %633 = vmatprep.subr.bf16.mxu0 %v441
    %634 = vmatpush1.bf16.msra.mxu0 %v440
    %635 = vmatprep.subr.bf16.mxu0 %v435
    %636 = vmatpush1.bf16.msra.mxu0 %v434
    %637 = vmatprep.subr.bf16.mxu0 %v429
    %638 = vmatpush1.bf16.msra.mxu0 %v428
    %639 = vmatprep.subr.bf16.mxu0 %v423
    %640 = vmatpush1.bf16.msra.mxu0 %v422
    %641 = vmatprep.subr.bf16.mxu0 0
    %642 = vmatpush2.bf16.msra.mxu0 0
    %643 = vmatprep.subr.bf16.mxu0 0
    %644 = vmatpush2.bf16.msra.mxu0 0
    %645 = vmatprep.subr.bf16.mxu0 0
    %646 = vmatpush2.bf16.msra.mxu0 0
    %647 = vmatprep.subr.bf16.mxu0 0
    %648 = vmatpush2.bf16.msra.mxu0 0
    %649 = vmatprep.subr.bf16.mxu0 0
    %650 = vmatpush2.bf16.msra.mxu0 0
    %651 = vmatprep.subr.bf16.mxu0 0
    %652 = vmatpush2.bf16.msra.mxu0 0
    %653 = vmatprep.subr.bf16.mxu0 0
    %654 = vmatpush2.bf16.msra.mxu0 0
    %655 = vmatprep.subr.bf16.mxu0 %v471
    %656 = vmatpush2.bf16.msra.mxu0 %v470
    %657 = vmatprep.mubr.bf16.mxu0 %v537
    %658 = vmatmul.mubr.bf16.gmra.mxu0 %v288
    %v659 = vpop.f32.mrf.mxu0
    %v660 = vadd.f32 %v275, %v659
    %v661 = vpop.f32.mrf.mxu0
    %v662 = vadd.f32 %v275, %v661
    %v663 = vpop.f32.mrf.mxu0
    %v664 = vadd.f32 %v280, %v663
    %v665 = vpop.f32.mrf.mxu0
    %v666 = vadd.f32 %v280, %v665
    %667 = vdwg.mxu0
    %668 = vmatprep.subr.bf16.mxu0 0
    %669 = vmatpush1.bf16.msra.mxu0 %v402
    %670 = vmatprep.subr.bf16.mxu0 0
    %671 = vmatpush1.bf16.msra.mxu0 %v388
    %672 = vmatprep.subr.bf16.mxu0 0
    %673 = vmatpush1.bf16.msra.mxu0 %v374
    %674 = vmatprep.subr.bf16.mxu0 0
    %675 = vmatpush1.bf16.msra.mxu0 %v360
    %676 = vmatprep.subr.bf16.mxu0 0
    %677 = vmatpush1.bf16.msra.mxu0 %v346
    %678 = vmatprep.subr.bf16.mxu0 0
    %679 = vmatpush1.bf16.msra.mxu0 %v332
    %680 = vmatprep.subr.bf16.mxu0 0
    %681 = vmatpush1.bf16.msra.mxu0 %v318
    %682 = vmatprep.subr.bf16.mxu0 0
    %683 = vmatpush1.bf16.msra.mxu0 %v304
    %684 = vmatprep.subr.bf16.mxu0 0
    %685 = vmatpush2.bf16.msra.mxu0 0
    %686 = vmatprep.subr.bf16.mxu0 0
    %687 = vmatpush2.bf16.msra.mxu0 0
    %688 = vmatprep.subr.bf16.mxu0 0
    %689 = vmatpush2.bf16.msra.mxu0 0
    %690 = vmatprep.subr.bf16.mxu0 0
    %691 = vmatpush2.bf16.msra.mxu0 0
    %692 = vmatprep.subr.bf16.mxu0 0
    %693 = vmatpush2.bf16.msra.mxu0 0
    %694 = vmatprep.subr.bf16.mxu0 0
    %695 = vmatpush2.bf16.msra.mxu0 0
    %696 = vmatprep.subr.bf16.mxu0 0
    %697 = vmatpush2.bf16.msra.mxu0 0
    %698 = vmatprep.subr.bf16.mxu0 0
    %699 = vmatpush2.bf16.msra.mxu0 %v416
    %700 = vmatprep.mubr.bf16.mxu0 %v537
    %701 = vmatmul.mubr.bf16.gmra.mxu0 %v288
    %v702 = vpop.f32.mrf.mxu0
    %v703 = vadd.f32 %v275, %v702
    %v704 = vpop.f32.mrf.mxu0
    %v705 = vpop.f32.mrf.mxu0
    %v706 = vadd.f32 %v280, %v705
    %v707 = vpop.f32.mrf.mxu0
    %708 = vdwg.mxu0
    %v709 = vxor.u32 %v574, 2147483648
    %v710 = vxor.u32 %v576, 2147483648
    %v711 = vxor.u32 %v617, 2147483648
    %v712 = vxor.u32 %v619, 2147483648
    %v713 = vxor.u32 %v660, 2147483648
    %v714 = vxor.u32 %v662, 2147483648
    %v715 = vxor.u32 %v703, 2147483648
    %v716 = vxor.u32 %v578, 2147483648
    %v717 = vxor.u32 %v580, 2147483648
    %v718 = vxor.u32 %v621, 2147483648
    %v719 = vxor.u32 %v623, 2147483648
    %v720 = vxor.u32 %v664, 2147483648
    %v721 = vxor.u32 %v666, 2147483648
    %v722 = vxor.u32 %v706, 2147483648
    %v723 = vmul.f32 %v709, 1.442695
    %v724 = vpow.pop %v723
    %v725 = vmul.f32 %v710, 1.442695
    %v726 = vpow.pop %v725
    %v727 = vmul.f32 %v711, 1.442695
    %v728 = vpow.pop %v727
    %v729 = vmul.f32 %v712, 1.442695
    %v730 = vpow.pop %v729
    %v731 = vmul.f32 %v713, 1.442695
    %v732 = vpow.pop %v731
    %v733 = vmul.f32 %v714, 1.442695
    %v734 = vpow.pop %v733
    %v735 = vmul.f32 %v715, 1.442695
    %v736 = vpow.pop %v735
    %v737 = vmul.f32 %v716, 1.442695
    %v738 = vpow.pop %v737
    %v739 = vmul.f32 %v717, 1.442695
    %v740 = vpow.pop %v739
    %v741 = vmul.f32 %v718, 1.442695
    %v742 = vpow.pop %v741
    %v743 = vmul.f32 %v719, 1.442695
    %v744 = vpow.pop %v743
    %v745 = vmul.f32 %v720, 1.442695
    %v746 = vpow.pop %v745
    %v747 = vmul.f32 %v721, 1.442695
    %v748 = vpow.pop %v747
    %v749 = vmul.f32 %v722, 1.442695
    %v750 = vpow.pop %v749
    %v751 = vadd.f32 %v724, 1.0
    %v752 = vadd.f32 %v726, 1.0
    %v753 = vadd.f32 %v728, 1.0
    %v754 = vadd.f32 %v730, 1.0
    %v755 = vadd.f32 %v732, 1.0
    %v756 = vadd.f32 %v734, 1.0
    %v757 = vadd.f32 %v736, 1.0
    %v758 = vadd.f32 %v738, 1.0
    %v759 = vadd.f32 %v740, 1.0
    %v760 = vadd.f32 %v742, 1.0
    %v761 = vadd.f32 %v744, 1.0
    %v762 = vadd.f32 %v746, 1.0
    %v763 = vadd.f32 %v748, 1.0
    %v764 = vadd.f32 %v750, 1.0
    %v765 = vrcp.pop %v751
    %v766 = vmul.f32 1.0, %v765
    %v767 = vrcp.pop %v752
    %v768 = vmul.f32 1.0, %v767
    %v769 = vrcp.pop %v753
    %v770 = vmul.f32 1.0, %v769
    %v771 = vrcp.pop %v754
    %v772 = vmul.f32 1.0, %v771
    %v773 = vrcp.pop %v755
    %v774 = vmul.f32 1.0, %v773
    %v775 = vrcp.pop %v756
    %v776 = vmul.f32 1.0, %v775
    %v777 = vrcp.pop %v757
    %v778 = vmul.f32 1.0, %v777
    %v779 = vrcp.pop %v758
    %v780 = vmul.f32 1.0, %v779
    %v781 = vrcp.pop %v759
    %v782 = vmul.f32 1.0, %v781
    %v783 = vrcp.pop %v760
    %v784 = vmul.f32 1.0, %v783
    %v785 = vrcp.pop %v761
    %v786 = vmul.f32 1.0, %v785
    %v787 = vrcp.pop %v762
    %v788 = vmul.f32 1.0, %v787
    %v789 = vrcp.pop %v763
    %v790 = vmul.f32 1.0, %v789
    %v791 = vrcp.pop %v764
    %v792 = vmul.f32 1.0, %v791
    %v793 = vmul.f32 %v574, %v766
    %v794 = vmul.f32 %v576, %v768
    %v795 = vmul.f32 %v617, %v770
    %v796 = vmul.f32 %v619, %v772
    %v797 = vmul.f32 %v660, %v774
    %v798 = vmul.f32 %v662, %v776
    %v799 = vmul.f32 %v703, %v778
    %v800 = vmul.f32 %v578, %v780
    %v801 = vmul.f32 %v580, %v782
    %v802 = vmul.f32 %v621, %v784
    %v803 = vmul.f32 %v623, %v786
    %v804 = vmul.f32 %v664, %v788
    %v805 = vmul.f32 %v666, %v790
    %v806 = vmul.f32 %v706, %v792
    %v807 = vld [vmem:[%s5] sm:$0x7f]
    %v809 = vlaneseq
    %v810 = vshrl.u32 %v809, 7
    %v811 = vsub.s32 0, %v810
    %v812 = vrot.slane %v807, %v811
    %v813 = vlaneseq
    %v814 = vshrl.u32 %v813, 7
    %v815 = vsub.s32 1, %v814
    %v816 = vrot.slane %v807, %v815
    %v817 = vlaneseq
    %v818 = vshrl.u32 %v817, 7
    %v819 = vsub.s32 2, %v818
    %v820 = vrot.slane %v807, %v819
    %v821 = vlaneseq
    %v822 = vshrl.u32 %v821, 7
    %v823 = vsub.s32 3, %v822
    %v824 = vrot.slane %v807, %v823
    %v825 = vlaneseq
    %v826 = vshrl.u32 %v825, 7
    %v827 = vsub.s32 4, %v826
    %v828 = vrot.slane %v807, %v827
    %v829 = vlaneseq
    %v830 = vshrl.u32 %v829, 7
    %v831 = vsub.s32 5, %v830
    %v832 = vrot.slane %v807, %v831
    %v833 = vlaneseq
    %v834 = vshrl.u32 %v833, 7
    %v835 = vsub.s32 6, %v834
    %v836 = vrot.slane %v807, %v835
    %v844 = vmul.f32 %v793, %v812
    %v845 = vmul.f32 %v794, %v816
    %v846 = vmul.f32 %v795, %v820
    %v847 = vmul.f32 %v796, %v824
    %v848 = vmul.f32 %v797, %v828
    %v849 = vmul.f32 %v798, %v832
    %v850 = vmul.f32 %v799, %v836
    %v851 = vmul.f32 %v800, %v812
    %v852 = vmul.f32 %v801, %v816
    %v853 = vmul.f32 %v802, %v820
    %v854 = vmul.f32 %v803, %v824
    %v855 = vmul.f32 %v804, %v828
    %v856 = vmul.f32 %v805, %v832
    %v857 = vmul.f32 %v806, %v836
    %v858 = vpack.c.bf16 %v851, %v844
    %v859 = vpack.c.bf16 %v852, %v845
    %v860 = vpack.c.bf16 %v853, %v846
    %v861 = vpack.c.bf16 %v854, %v847
    %v862 = vpack.c.bf16 %v855, %v848
    %v863 = vpack.c.bf16 %v856, %v849
    %v864 = vpack.c.bf16 %v857, %v850
    %872 = vrot.lane.b32.xlu0 %v858, 127
    %v873 = vpop.permute.xlu0 %872
    %874 = vrot.lane.b32.xlu0 %v859, 127
    %v875 = vpop.permute.xlu0 %874
    %876 = vrot.lane.b32.xlu0 %v860, 127
    %v877 = vpop.permute.xlu0 %876
    %878 = vrot.lane.b32.xlu0 %v861, 127
    %v879 = vpop.permute.xlu0 %878
    %880 = vrot.lane.b32.xlu0 %v862, 127
    %v881 = vpop.permute.xlu0 %880
    %882 = vrot.lane.b32.xlu0 %v863, 127
    %v883 = vpop.permute.xlu0 %882
    %884 = vrot.lane.b32.xlu0 %v864, 127
    %v885 = vpop.permute.xlu0 %884
    %v886 = vsel %vm95, %v873, %v875
    %v887 = vsel %vm95, %v875, %v877
    %v888 = vsel %vm95, %v877, %v879
    %v889 = vsel %vm95, %v879, %v881
    %v890 = vsel %vm95, %v881, %v883
    %v891 = vsel %vm95, %v883, %v885
    %898 = vrot.lane.b32.xlu0 %v858, 126
    %v899 = vpop.permute.xlu0 %898
    %900 = vrot.lane.b32.xlu0 %v859, 126
    %v901 = vpop.permute.xlu0 %900
    %902 = vrot.lane.b32.xlu0 %v860, 126
    %v903 = vpop.permute.xlu0 %902
    %904 = vrot.lane.b32.xlu0 %v861, 126
    %v905 = vpop.permute.xlu0 %904
    %906 = vrot.lane.b32.xlu0 %v862, 126
    %v907 = vpop.permute.xlu0 %906
    %908 = vrot.lane.b32.xlu0 %v863, 126
    %v909 = vpop.permute.xlu0 %908
    %910 = vrot.lane.b32.xlu0 %v864, 126
    %v911 = vpop.permute.xlu0 %910
    %v912 = vsel %vm119, %v899, %v901
    %v913 = vsel %vm119, %v901, %v903
    %v914 = vsel %vm119, %v903, %v905
    %v915 = vsel %vm119, %v905, %v907
    %v916 = vsel %vm119, %v907, %v909
    %v917 = vsel %vm119, %v909, %v911
    %924 = vrot.lane.b32.xlu0 %v858, 110
    %v925 = vpop.permute.xlu0 %924
    %926 = vrot.lane.b32.xlu0 %v859, 110
    %v927 = vpop.permute.xlu0 %926
    %928 = vrot.lane.b32.xlu0 %v860, 110
    %v929 = vpop.permute.xlu0 %928
    %930 = vrot.lane.b32.xlu0 %v861, 110
    %v931 = vpop.permute.xlu0 %930
    %932 = vrot.lane.b32.xlu0 %v862, 110
    %v933 = vpop.permute.xlu0 %932
    %934 = vrot.lane.b32.xlu0 %v863, 110
    %v935 = vpop.permute.xlu0 %934
    %936 = vrot.lane.b32.xlu0 %v864, 110
    %v937 = vpop.permute.xlu0 %936
    %v938 = vsel %vm143, %v925, %v927
    %v939 = vsel %vm143, %v927, %v929
    %v940 = vsel %vm143, %v929, %v931
    %v941 = vsel %vm143, %v931, %v933
    %v942 = vsel %vm143, %v933, %v935
    %v943 = vsel %vm143, %v935, %v937
    %950 = vrot.lane.b32.xlu0 %v858, 109
    %v951 = vpop.permute.xlu0 %950
    %952 = vrot.lane.b32.xlu0 %v859, 109
    %v953 = vpop.permute.xlu0 %952
    %954 = vrot.lane.b32.xlu0 %v860, 109
    %v955 = vpop.permute.xlu0 %954
    %956 = vrot.lane.b32.xlu0 %v861, 109
    %v957 = vpop.permute.xlu0 %956
    %958 = vrot.lane.b32.xlu0 %v862, 109
    %v959 = vpop.permute.xlu0 %958
    %960 = vrot.lane.b32.xlu0 %v863, 109
    %v961 = vpop.permute.xlu0 %960
    %962 = vrot.lane.b32.xlu0 %v864, 109
    %v963 = vpop.permute.xlu0 %962
    %v964 = vsel %vm167, %v951, %v953
    %v965 = vsel %vm167, %v953, %v955
    %v966 = vsel %vm167, %v955, %v957
    %v967 = vsel %vm167, %v957, %v959
    %v968 = vsel %vm167, %v959, %v961
    %v969 = vsel %vm167, %v961, %v963
    %976 = vrot.lane.b32.xlu0 %v858, 108
    %v977 = vpop.permute.xlu0 %976
    %978 = vrot.lane.b32.xlu0 %v859, 108
    %v979 = vpop.permute.xlu0 %978
    %980 = vrot.lane.b32.xlu0 %v860, 108
    %v981 = vpop.permute.xlu0 %980
    %982 = vrot.lane.b32.xlu0 %v861, 108
    %v983 = vpop.permute.xlu0 %982
    %984 = vrot.lane.b32.xlu0 %v862, 108
    %v985 = vpop.permute.xlu0 %984
    %986 = vrot.lane.b32.xlu0 %v863, 108
    %v987 = vpop.permute.xlu0 %986
    %988 = vrot.lane.b32.xlu0 %v864, 108
    %v989 = vpop.permute.xlu0 %988
    %v990 = vsel %vm191, %v977, %v979
    %v991 = vsel %vm191, %v979, %v981
    %v992 = vsel %vm191, %v981, %v983
    %v993 = vsel %vm191, %v983, %v985
    %v994 = vsel %vm191, %v985, %v987
    %v995 = vsel %vm191, %v987, %v989
    %1002 = vrot.lane.b32.xlu0 %v858, 92
    %v1003 = vpop.permute.xlu0 %1002
    %1004 = vrot.lane.b32.xlu0 %v859, 92
    %v1005 = vpop.permute.xlu0 %1004
    %1006 = vrot.lane.b32.xlu0 %v860, 92
    %v1007 = vpop.permute.xlu0 %1006
    %1008 = vrot.lane.b32.xlu0 %v861, 92
    %v1009 = vpop.permute.xlu0 %1008
    %1010 = vrot.lane.b32.xlu0 %v862, 92
    %v1011 = vpop.permute.xlu0 %1010
    %1012 = vrot.lane.b32.xlu0 %v863, 92
    %v1013 = vpop.permute.xlu0 %1012
    %1014 = vrot.lane.b32.xlu0 %v864, 92
    %v1015 = vpop.permute.xlu0 %1014
    %v1016 = vsel %vm215, %v1003, %v1005
    %v1017 = vsel %vm215, %v1005, %v1007
    %v1018 = vsel %vm215, %v1007, %v1009
    %v1019 = vsel %vm215, %v1009, %v1011
    %v1020 = vsel %vm215, %v1011, %v1013
    %v1021 = vsel %vm215, %v1013, %v1015
    %1028 = vrot.lane.b32.xlu0 %v858, 91
    %v1029 = vpop.permute.xlu0 %1028
    %1030 = vrot.lane.b32.xlu0 %v859, 91
    %v1031 = vpop.permute.xlu0 %1030
    %1032 = vrot.lane.b32.xlu0 %v860, 91
    %v1033 = vpop.permute.xlu0 %1032
    %1034 = vrot.lane.b32.xlu0 %v861, 91
    %v1035 = vpop.permute.xlu0 %1034
    %1036 = vrot.lane.b32.xlu0 %v862, 91
    %v1037 = vpop.permute.xlu0 %1036
    %1038 = vrot.lane.b32.xlu0 %v863, 91
    %v1039 = vpop.permute.xlu0 %1038
    %1040 = vrot.lane.b32.xlu0 %v864, 91
    %v1041 = vpop.permute.xlu0 %1040
    %v1042 = vsel %vm239, %v1029, %v1031
    %v1043 = vsel %vm239, %v1031, %v1033
    %v1044 = vsel %vm239, %v1033, %v1035
    %v1045 = vsel %vm239, %v1035, %v1037
    %v1046 = vsel %vm239, %v1037, %v1039
    %v1047 = vsel %vm239, %v1039, %v1041
    %1054 = vrot.lane.b32.xlu0 %v858, 90
    %v1055 = vpop.permute.xlu0 %1054
    %1056 = vrot.lane.b32.xlu0 %v859, 90
    %v1057 = vpop.permute.xlu0 %1056
    %1058 = vrot.lane.b32.xlu0 %v860, 90
    %v1059 = vpop.permute.xlu0 %1058
    %1060 = vrot.lane.b32.xlu0 %v861, 90
    %v1061 = vpop.permute.xlu0 %1060
    %1062 = vrot.lane.b32.xlu0 %v862, 90
    %v1063 = vpop.permute.xlu0 %1062
    %1064 = vrot.lane.b32.xlu0 %v863, 90
    %v1065 = vpop.permute.xlu0 %1064
    %1066 = vrot.lane.b32.xlu0 %v864, 90
    %v1067 = vpop.permute.xlu0 %1066
    %v1068 = vsel %vm261, %v1055, %v1057
    %v1069 = vsel %vm261, %v1057, %v1059
    %v1070 = vsel %vm261, %v1059, %v1061
    %v1071 = vsel %vm261, %v1061, %v1063
    %v1072 = vsel %vm261, %v1063, %v1065
    %v1073 = vsel %vm261, %v1065, %v1067
    %v1080 = vld [vmem:[%s3] sm:$0xff]
    %v1081 = vld [vmem:[%s3 + $0x8] sm:$0xff]
    %v1082 = vld [vmem:[%s4] sm:$0xff]
    %v1083 = vld [vmem:[%s4 + $0x8] sm:$0xff]
    %1085 = vset.pattern.permute.xlu0 0
    %1086 = vperm.xlu0 %1085, %v1082
    %v1087 = vpop.permute.xlu0 %1086
    %1090 = vset.pattern.permute.xlu0 0
    %1091 = vperm.xlu0 %1090, %v1083
    %v1092 = vpop.permute.xlu0 %1091
    %v1096 = vunpack.c.l.b16 %v1080
    %v1097 = vunpack.c.h.b16 %v1080
    %v1098 = vunpack.c.l.b16 %v1081
    %v1099 = vunpack.c.h.b16 %v1081
    %v1100 = vpack.c.b16 %v1098, %v1096
    %v1101 = vpack.c.b16 %v1099, %v1097
    %v1104 = vsel %vm535, %v1101, 0
    %1106 = vmatprep.subr.bf16.mxu0 %v1043
    %1107 = vmatpush1.bf16.msra.mxu0 %v1042
    %1108 = vmatprep.subr.bf16.mxu0 %v1017
    %1109 = vmatpush1.bf16.msra.mxu0 %v1016
    %1110 = vmatprep.subr.bf16.mxu0 %v991
    %1111 = vmatpush1.bf16.msra.mxu0 %v990
    %1112 = vmatprep.subr.bf16.mxu0 %v965
    %1113 = vmatpush1.bf16.msra.mxu0 %v964
    %1114 = vmatprep.subr.bf16.mxu0 %v939
    %1115 = vmatpush1.bf16.msra.mxu0 %v938
    %1116 = vmatprep.subr.bf16.mxu0 %v913
    %1117 = vmatpush1.bf16.msra.mxu0 %v912
    %1118 = vmatprep.subr.bf16.mxu0 %v887
    %1119 = vmatpush1.bf16.msra.mxu0 %v886
    %1120 = vmatprep.subr.bf16.mxu0 %v859
    %1121 = vmatpush1.bf16.msra.mxu0 %v858
    %1122 = vmatprep.subr.bf16.mxu0 0
    %1123 = vmatpush2.bf16.msra.mxu0 0
    %1124 = vmatprep.subr.bf16.mxu0 0
    %1125 = vmatpush2.bf16.msra.mxu0 0
    %1126 = vmatprep.subr.bf16.mxu0 0
    %1127 = vmatpush2.bf16.msra.mxu0 0
    %1128 = vmatprep.subr.bf16.mxu0 0
    %1129 = vmatpush2.bf16.msra.mxu0 0
    %1130 = vmatprep.subr.bf16.mxu0 0
    %1131 = vmatpush2.bf16.msra.mxu0 0
    %1132 = vmatprep.subr.bf16.mxu0 0
    %1133 = vmatpush2.bf16.msra.mxu0 0
    %1134 = vmatprep.subr.bf16.mxu0 0
    %1135 = vmatpush2.bf16.msra.mxu0 0
    %1136 = vmatprep.subr.bf16.mxu0 %v1069
    %1137 = vmatpush2.bf16.msra.mxu0 %v1068
    %1138 = vmatprep.mubr.bf16.mxu0 %v1104
    %1139 = vmatmul.mubr.bf16.gmra.mxu0 %v1100
    %v1140 = vpop.f32.mrf.mxu0
    %v1141 = vadd.f32 %v1087, %v1140
    %v1142 = vpop.f32.mrf.mxu0
    %v1143 = vadd.f32 %v1087, %v1142
    %v1144 = vpop.f32.mrf.mxu0
    %v1145 = vadd.f32 %v1092, %v1144
    %v1146 = vpop.f32.mrf.mxu0
    %v1147 = vadd.f32 %v1092, %v1146
    %1148 = vdwg.mxu0
    %1149 = vmatprep.subr.bf16.mxu0 %v1045
    %1150 = vmatpush1.bf16.msra.mxu0 %v1044
    %1151 = vmatprep.subr.bf16.mxu0 %v1019
    %1152 = vmatpush1.bf16.msra.mxu0 %v1018
    %1153 = vmatprep.subr.bf16.mxu0 %v993
    %1154 = vmatpush1.bf16.msra.mxu0 %v992
    %1155 = vmatprep.subr.bf16.mxu0 %v967
    %1156 = vmatpush1.bf16.msra.mxu0 %v966
    %1157 = vmatprep.subr.bf16.mxu0 %v941
    %1158 = vmatpush1.bf16.msra.mxu0 %v940
    %1159 = vmatprep.subr.bf16.mxu0 %v915
    %1160 = vmatpush1.bf16.msra.mxu0 %v914
    %1161 = vmatprep.subr.bf16.mxu0 %v889
    %1162 = vmatpush1.bf16.msra.mxu0 %v888
    %1163 = vmatprep.subr.bf16.mxu0 %v861
    %1164 = vmatpush1.bf16.msra.mxu0 %v860
    %1165 = vmatprep.subr.bf16.mxu0 0
    %1166 = vmatpush2.bf16.msra.mxu0 0
    %1167 = vmatprep.subr.bf16.mxu0 0
    %1168 = vmatpush2.bf16.msra.mxu0 0
    %1169 = vmatprep.subr.bf16.mxu0 0
    %1170 = vmatpush2.bf16.msra.mxu0 0
    %1171 = vmatprep.subr.bf16.mxu0 0
    %1172 = vmatpush2.bf16.msra.mxu0 0
    %1173 = vmatprep.subr.bf16.mxu0 0
    %1174 = vmatpush2.bf16.msra.mxu0 0
    %1175 = vmatprep.subr.bf16.mxu0 0
    %1176 = vmatpush2.bf16.msra.mxu0 0
    %1177 = vmatprep.subr.bf16.mxu0 0
    %1178 = vmatpush2.bf16.msra.mxu0 0
    %1179 = vmatprep.subr.bf16.mxu0 %v1071
    %1180 = vmatpush2.bf16.msra.mxu0 %v1070
    %1181 = vmatprep.mubr.bf16.mxu0 %v1104
    %1182 = vmatmul.mubr.bf16.gmra.mxu0 %v1100
    %v1183 = vpop.f32.mrf.mxu0
    %v1184 = vadd.f32 %v1087, %v1183
    %v1185 = vpop.f32.mrf.mxu0
    %v1186 = vadd.f32 %v1087, %v1185
    %v1187 = vpop.f32.mrf.mxu0
    %v1188 = vadd.f32 %v1092, %v1187
    %v1189 = vpop.f32.mrf.mxu0
    %v1190 = vadd.f32 %v1092, %v1189
    %1191 = vdwg.mxu0
    %1192 = vmatprep.subr.bf16.mxu0 %v1047
    %1193 = vmatpush1.bf16.msra.mxu0 %v1046
    %1194 = vmatprep.subr.bf16.mxu0 %v1021
    %1195 = vmatpush1.bf16.msra.mxu0 %v1020
    %1196 = vmatprep.subr.bf16.mxu0 %v995
    %1197 = vmatpush1.bf16.msra.mxu0 %v994
    %1198 = vmatprep.subr.bf16.mxu0 %v969
    %1199 = vmatpush1.bf16.msra.mxu0 %v968
    %1200 = vmatprep.subr.bf16.mxu0 %v943
    %1201 = vmatpush1.bf16.msra.mxu0 %v942
    %1202 = vmatprep.subr.bf16.mxu0 %v917
    %1203 = vmatpush1.bf16.msra.mxu0 %v916
    %1204 = vmatprep.subr.bf16.mxu0 %v891
    %1205 = vmatpush1.bf16.msra.mxu0 %v890
    %1206 = vmatprep.subr.bf16.mxu0 %v863
    %1207 = vmatpush1.bf16.msra.mxu0 %v862
    %1208 = vmatprep.subr.bf16.mxu0 0
    %1209 = vmatpush2.bf16.msra.mxu0 0
    %1210 = vmatprep.subr.bf16.mxu0 0
    %1211 = vmatpush2.bf16.msra.mxu0 0
    %1212 = vmatprep.subr.bf16.mxu0 0
    %1213 = vmatpush2.bf16.msra.mxu0 0
    %1214 = vmatprep.subr.bf16.mxu0 0
    %1215 = vmatpush2.bf16.msra.mxu0 0
    %1216 = vmatprep.subr.bf16.mxu0 0
    %1217 = vmatpush2.bf16.msra.mxu0 0
    %1218 = vmatprep.subr.bf16.mxu0 0
    %1219 = vmatpush2.bf16.msra.mxu0 0
    %1220 = vmatprep.subr.bf16.mxu0 0
    %1221 = vmatpush2.bf16.msra.mxu0 0
    %1222 = vmatprep.subr.bf16.mxu0 %v1073
    %1223 = vmatpush2.bf16.msra.mxu0 %v1072
    %1224 = vmatprep.mubr.bf16.mxu0 %v1104
    %1225 = vmatmul.mubr.bf16.gmra.mxu0 %v1100
    %v1226 = vpop.f32.mrf.mxu0
    %v1227 = vadd.f32 %v1087, %v1226
    %v1228 = vpop.f32.mrf.mxu0
    %v1229 = vadd.f32 %v1087, %v1228
    %v1230 = vpop.f32.mrf.mxu0
    %v1231 = vadd.f32 %v1092, %v1230
    %v1232 = vpop.f32.mrf.mxu0
    %v1233 = vadd.f32 %v1092, %v1232
    %1234 = vdwg.mxu0
    %v1235 = vxor.u32 %v1141, 2147483648
    %v1236 = vxor.u32 %v1143, 2147483648
    %v1237 = vxor.u32 %v1184, 2147483648
    %v1238 = vxor.u32 %v1186, 2147483648
    %v1239 = vxor.u32 %v1227, 2147483648
    %v1240 = vxor.u32 %v1229, 2147483648
    %v1241 = vxor.u32 %v1145, 2147483648
    %v1242 = vxor.u32 %v1147, 2147483648
    %v1243 = vxor.u32 %v1188, 2147483648
    %v1244 = vxor.u32 %v1190, 2147483648
    %v1245 = vxor.u32 %v1231, 2147483648
    %v1246 = vxor.u32 %v1233, 2147483648
    %v1247 = vmul.f32 %v1235, 1.442695
    %v1248 = vpow.pop %v1247
    %v1249 = vmul.f32 %v1236, 1.442695
    %v1250 = vpow.pop %v1249
    %v1251 = vmul.f32 %v1237, 1.442695
    %v1252 = vpow.pop %v1251
    %v1253 = vmul.f32 %v1238, 1.442695
    %v1254 = vpow.pop %v1253
    %v1255 = vmul.f32 %v1239, 1.442695
    %v1256 = vpow.pop %v1255
    %v1257 = vmul.f32 %v1240, 1.442695
    %v1258 = vpow.pop %v1257
    %v1259 = vmul.f32 %v1241, 1.442695
    %v1260 = vpow.pop %v1259
    %v1261 = vmul.f32 %v1242, 1.442695
    %v1262 = vpow.pop %v1261
    %v1263 = vmul.f32 %v1243, 1.442695
    %v1264 = vpow.pop %v1263
    %v1265 = vmul.f32 %v1244, 1.442695
    %v1266 = vpow.pop %v1265
    %v1267 = vmul.f32 %v1245, 1.442695
    %v1268 = vpow.pop %v1267
    %v1269 = vmul.f32 %v1246, 1.442695
    %v1270 = vpow.pop %v1269
    %v1271 = vadd.f32 %v1248, 1.0
    %v1272 = vadd.f32 %v1250, 1.0
    %v1273 = vadd.f32 %v1252, 1.0
    %v1274 = vadd.f32 %v1254, 1.0
    %v1275 = vadd.f32 %v1256, 1.0
    %v1276 = vadd.f32 %v1258, 1.0
    %v1277 = vadd.f32 %v1260, 1.0
    %v1278 = vadd.f32 %v1262, 1.0
    %v1279 = vadd.f32 %v1264, 1.0
    %v1280 = vadd.f32 %v1266, 1.0
    %v1281 = vadd.f32 %v1268, 1.0
    %v1282 = vadd.f32 %v1270, 1.0
    %v1283 = vrcp.pop %v1271
    %v1284 = vmul.f32 1.0, %v1283
    %v1285 = vrcp.pop %v1272
    %v1286 = vmul.f32 1.0, %v1285
    %v1287 = vrcp.pop %v1273
    %v1288 = vmul.f32 1.0, %v1287
    %v1289 = vrcp.pop %v1274
    %v1290 = vmul.f32 1.0, %v1289
    %v1291 = vrcp.pop %v1275
    %v1292 = vmul.f32 1.0, %v1291
    %v1293 = vrcp.pop %v1276
    %v1294 = vmul.f32 1.0, %v1293
    %v1295 = vrcp.pop %v1277
    %v1296 = vmul.f32 1.0, %v1295
    %v1297 = vrcp.pop %v1278
    %v1298 = vmul.f32 1.0, %v1297
    %v1299 = vrcp.pop %v1279
    %v1300 = vmul.f32 1.0, %v1299
    %v1301 = vrcp.pop %v1280
    %v1302 = vmul.f32 1.0, %v1301
    %v1303 = vrcp.pop %v1281
    %v1304 = vmul.f32 1.0, %v1303
    %v1305 = vrcp.pop %v1282
    %v1306 = vmul.f32 1.0, %v1305
    %v1307 = vmul.f32 %v1141, %v1284
    %v1308 = vmul.f32 %v1143, %v1286
    %v1309 = vmul.f32 %v1184, %v1288
    %v1310 = vmul.f32 %v1186, %v1290
    %v1311 = vmul.f32 %v1227, %v1292
    %v1312 = vmul.f32 %v1229, %v1294
    %v1313 = vmul.f32 %v1145, %v1296
    %v1314 = vmul.f32 %v1147, %v1298
    %v1315 = vmul.f32 %v1188, %v1300
    %v1316 = vmul.f32 %v1190, %v1302
    %v1317 = vmul.f32 %v1231, %v1304
    %v1318 = vmul.f32 %v1233, %v1306
    %v1319 = vrot.slane %v39, 4
    %v1320 = vrot.slane %v40, 4
    %v1321 = vrot.slane %v41, 4
    %v1322 = vrot.slane %v42, 4
    %v1323 = vrot.slane %v43, 4
    %v1324 = vrot.slane %v44, 4
    %v1325 = vrot.slane %v45, 4
    %v1326 = vrot.slane %v46, 4
    %vm1327 = vcmask 1043456
    %v1328 = vsel %vm1327, %v1319, %v1320
    %v1329 = vsel %vm1327, %v1320, %v1321
    %v1330 = vsel %vm1327, %v1321, %v1322
    %v1331 = vsel %vm1327, %v1323, %v1324
    %v1332 = vsel %vm1327, %v1324, %v1325
    %v1333 = vsel %vm1327, %v1325, %v1326
    %v1340 = vunpack.c.l.bf16 %v1328
    %v1341 = vunpack.c.h.bf16 %v1328
    %v1342 = vunpack.c.l.bf16 %v1329
    %v1343 = vunpack.c.h.bf16 %v1329
    %v1344 = vunpack.c.l.bf16 %v1330
    %v1345 = vunpack.c.h.bf16 %v1330
    %v1346 = vunpack.c.l.bf16 %v1331
    %v1347 = vunpack.c.h.bf16 %v1331
    %v1348 = vunpack.c.l.bf16 %v1332
    %v1349 = vunpack.c.h.bf16 %v1332
    %v1350 = vunpack.c.l.bf16 %v1333
    %v1351 = vunpack.c.h.bf16 %v1333
    %v1352 = vadd.f32 %v1307, %v1340
    %v1353 = vadd.f32 %v1308, %v1341
    %v1354 = vadd.f32 %v1309, %v1342
    %v1355 = vadd.f32 %v1310, %v1343
    %v1356 = vadd.f32 %v1311, %v1344
    %v1357 = vadd.f32 %v1312, %v1345
    %v1358 = vadd.f32 %v1313, %v1346
    %v1359 = vadd.f32 %v1314, %v1347
    %v1360 = vadd.f32 %v1315, %v1348
    %v1361 = vadd.f32 %v1316, %v1349
    %v1362 = vadd.f32 %v1317, %v1350
    %v1363 = vadd.f32 %v1318, %v1351
    %1364 = vst [vmem:[#allocation5] sm:$0xff] %v1352
    %1365 = vst [vmem:[#allocation5 + $0x8] sm:$0xff] %v1353
    %1366 = vst [vmem:[#allocation5 + $0x10] sm:$0xff] %v1354
    %1367 = vst [vmem:[#allocation5 + $0x18] sm:$0xff] %v1355
    %1368 = vst [vmem:[#allocation5 + $0x20] sm:$0xff] %v1356
    %1369 = vst [vmem:[#allocation5 + $0x28] sm:$0xff] %v1357
    %1370 = vst [vmem:[#allocation5 + $0x30] sm:$0xff] %v1358
    %1371 = vst [vmem:[#allocation5 + $0x38] sm:$0xff] %v1359
    %1372 = vst [vmem:[#allocation5 + $0x40] sm:$0xff] %v1360
    %1373 = vst [vmem:[#allocation5 + $0x48] sm:$0xff] %v1361
    %1374 = vst [vmem:[#allocation5 + $0x50] sm:$0xff] %v1362
    %1375 = vst [vmem:[#allocation5 + $0x58] sm:$0xff] %v1363
    // Predicated region
    $region30: #{tpu_custom_call.1} parent=1 // pred_check
      _
    $region31: #{tpu_custom_call.1} parent=1 // pred_check_branch
      %1377 = sbr.rel (0) target = $region33
    $region32: #{tpu_custom_call.1} parent=1 // pred_region
      %s1379 = ssub.s32 1536, 1536
      %1380 = vsyncadd [#allocation4], %s1379
      %s1381 = sshll.u32 [#allocation5], 4
      %s1382 = int_to_ptr.vmem [resolvable:$true] %s1381
      %1387 = dma.vmem_to_hbm [thread:$0]  %s1382, 1536, %s6, [#allocation4], 768, 768, 48
    $region33: #{tpu_custom_call.1} parent=1 // pred_fallthru
      _
    // Predicated region
    $region34: #{tpu_custom_call.1} parent=1 // pred_check
      _
    $region35: #{tpu_custom_call.1} parent=1 // pred_check_branch
      %1389 = sbr.rel (0) target = $region37
    $region36: #{tpu_custom_call.1} parent=1 // pred_region
      %1390 = dma.done [#allocation4], 1536
    $region37: #{tpu_custom_call.1} parent=1 // pred_fallthru
      _
    %1391 = vsyncpa [#allocation3], 1
    %1392 = vsyncpa [#allocation4], 1

</llo_original>
